<compile_context>
chip_gen: v5e
topology: v5e:2x2
jax: 0.10.0
libtpu: 0.0.40
codegen_flags: <defaults>
</compile_context>

<pallas_src>
import jax
import jax.numpy as jnp
import numpy as np
from jax import lax
from jax.experimental import pallas as pl
from jax.experimental.pallas import tpu as pltpu

DIMS = [768, 1024, 128, 64, 16, 1]


def _affine_kernel(x_ref, w_ref, b_ref, o_ref):
    # One MXU matmul per batch tile (f32 accumulation) + scalar bias epilogue.
    # b_ref lives in SMEM (a single scalar) -> no padded VMEM operand for it.
    acc = jnp.dot(x_ref[...], w_ref[...], preferred_element_type=jnp.float32)
    o_ref[...] = (acc + b_ref[0, 0]).astype(o_ref.dtype)


def init_params(key, dtype=jnp.float32):
    """Deterministic synthetic parameters matching nn.Linear shapes.

    PyTorch nn.Linear(in, out) stores weight as (out, in); we keep the transpose
    (in, out) so the math is x @ W.  Biases are (1, out)."""
    params = []
    for i in range(len(DIMS) - 1):
        d_in, d_out = DIMS[i], DIMS[i + 1]
        key, kw, kb = jax.random.split(key, 3)
        scale = 1.0 / np.sqrt(d_in)
        w = (jax.random.uniform(kw, (d_in, d_out), jnp.float32, -1.0, 1.0) * scale).astype(dtype)
        b = (jax.random.uniform(kb, (1, d_out), jnp.float32, -1.0, 1.0) * scale).astype(dtype)
        params.append((w, b))
    return params


def fold_params(params):
    """One-time host-side fold of the all-affine chain into (768,1) / (1,1).

    VALID ONLY AT INFERENCE (Dropout == identity, no nonlinearities).  Done in
    float64 on the host so the folded map agrees with the layered forward to well
    under f32 roundoff; cast to f32 for the kernel (zero runtime cost)."""
    w_fold = np.asarray(params[0][0], dtype=np.float64)
    b_fold = np.asarray(params[0][1], dtype=np.float64)
    for w, b in params[1:]:
        w64 = np.asarray(w, dtype=np.float64)
        w_fold = w_fold @ w64
        b_fold = b_fold @ w64 + np.asarray(b, dtype=np.float64)
    return jnp.asarray(w_fold, dtype=jnp.float32), jnp.asarray(b_fold, dtype=jnp.float32)


def _select_tile(B, tm):
    """Batch-tile selection driven purely by DMA amortization / VMEM headroom.

    - Big tiles amortize the ~0.35us/grid-step overhead against the HBM-bound x
      stream (tm=1024 ~ 85% of HBM roofline on v6e; pass tm=2048..4096 on v7x,
      still under its 32 MiB scoped-VMEM default when double-buffered).
    - When the whole batch fits in one tile, split it into two 8-aligned tiles so
      the grid has >= 2 steps and ("parallel",) can feed both v7x TensorCores.
    - Tiny / odd batches fall back to a single full-array block (always layout-legal).
    """
    tm = max(8, (tm // 8) * 8)
    if B > tm:
        return tm
    half = B // 2
    if half >= 8 and half % 8 == 0:
        return half
    return B


def mlp_forward(x, w_fold, b_fold, *, tm=1024):
    """y = x @ W_fold + b_fold, batch-tiled over a 1-D grid with resident weights."""
    B, D = x.shape
    assert D == DIMS[0], (B, D)
    d_out = DIMS[-1]

    tm_eff = _select_tile(B, tm)
    grid = (pl.cdiv(B, tm_eff),)

    return pl.pallas_call(
        _affine_kernel,
        out_shape=jax.ShapeDtypeStruct((B, d_out), x.dtype),
        grid_spec=pltpu.PrefetchScalarGridSpec(
            num_scalar_prefetch=0,
            grid=grid,
            in_specs=[
                pl.BlockSpec((tm_eff, D), lambda i: (i, 0)),        # x tile, double-buffered stream
                pl.BlockSpec((D, d_out), lambda i: (0, 0)),         # folded weight (3 KB), resident
                pl.BlockSpec(memory_space=pltpu.MemorySpace.SMEM),  # folded bias: one scalar in SMEM
            ],
            out_specs=pl.BlockSpec((tm_eff, d_out), lambda i: (i, 0)),
        ),
        # Independent batch tiles -> parallel (shards across v7x's two TCs; no-op on
        # single-TC v5e/v6e).  No vmem_limit_bytes: footprint is a few MiB, default
        # scoped limits are ample on every generation.
        compiler_params=pltpu.CompilerParams(
            dimension_semantics=("parallel",),
        ),
    )(x, w_fold, b_fold)


def mlp_reference(x, params):
    """Faithful layered (unfolded) forward, f32 at HIGHEST precision."""
    h = x.astype(jnp.float32)
    for w, b in params:
        h = jnp.dot(h, w.astype(jnp.float32), precision=lax.Precision.HIGHEST)
        h = h + b.astype(jnp.float32)
    return h.astype(x.dtype)


if __name__ == "__main__":
    key = jax.random.PRNGKey(0)
    key, kx = jax.random.split(key)

    params = init_params(key)
    w_fold, b_fold = fold_params(params)   # one-time inference-only fold

    def check(B, seed):
        x = jax.random.normal(jax.random.PRNGKey(seed), (B, DIMS[0]), jnp.float32)
        out = jax.block_until_ready(mlp_forward(x, w_fold, b_fold))
        ref = mlp_reference(x, params)
        assert out.shape == (B, 1), out.shape
        assert jnp.allclose(out, ref, atol=1e-4, rtol=1e-4), (B,)

    check(8, 1)      # tiny batch: single full-array block
    check(256, 2)    # fits one tile: auto-split to 2x128 so both v7x TCs get work
    check(2048, 3)   # multi-tile pipelined path at tm=1024

    print("KERNEL_OK")
</pallas_src>

<mosaic_0001>
module attributes {stable_mosaic.version = 11 : i64} {
  func.func @_affine_kernel(%arg0: i32, %arg1: memref<8x768xf32, #tpu.memory_space<vmem>>, %arg2: memref<768x1xf32, #tpu.memory_space<vmem>>, %arg3: memref<1x1xf32, #tpu.memory_space<smem>>, %arg4: memref<8x1xf32, #tpu.memory_space<vmem>>) attributes {dimension_semantics = [#tpu.dimension_semantics<parallel>], iteration_bounds = array<i64: 1>, scalar_prefetch = 0 : i64, scratch_operands = 0 : i64, tpu.core_type = #tpu.core_type<tc>, window_params = [{transform_indices = @transform_0, window_bounds = array<i64: 8, 768>}, {pipeline_mode = #tpu.pipeline_mode<synchronous>, transform_indices = @transform_1, window_bounds = array<i64: 768, 1>}, {transform_indices = @transform_2, window_bounds = array<i64: 1, 1>}, {transform_indices = @transform_3, window_bounds = array<i64: 8, 1>}]} {
    %c0 = arith.constant 0 : index
    %c0_0 = arith.constant 0 : index
    %0 = vector.load %arg1[%c0, %c0_0] : memref<8x768xf32, #tpu.memory_space<vmem>>, vector<8x768xf32>
    %c0_1 = arith.constant 0 : index
    %c0_2 = arith.constant 0 : index
    %1 = vector.load %arg2[%c0_1, %c0_2] : memref<768x1xf32, #tpu.memory_space<vmem>>, vector<768x1xf32>
    %cst = arith.constant dense<0.000000e+00> : vector<8x1xf32>
    %2 = tpu.matmul %0, %1, %cst {dimension_numbers = #tpu.dot_dimension_numbers<[1], [0], [0], [1], [0, 0, 1, 1], [], []>} : vector<8x768xf32>, vector<768x1xf32>, vector<8x1xf32> -> vector<8x1xf32>
    %c0_3 = arith.constant 0 : index
    %c0_4 = arith.constant 0 : index
    %3 = memref.load %arg3[%c0_3, %c0_4] : memref<1x1xf32, #tpu.memory_space<smem>>
    %4 = vector.broadcast %3 : f32 to vector<8x1xf32>
    %5 = arith.addf %2, %4 : vector<8x1xf32>
    %c0_5 = arith.constant 0 : index
    %c0_6 = arith.constant 0 : index
    %6 = vector.load %arg4[%c0_5, %c0_6] : memref<8x1xf32, #tpu.memory_space<vmem>>, vector<8x1xf32>
    tpu.vector_store %arg4[%c0_5, %c0_6], %5 {strides = array<i32>} : memref<8x1xf32, #tpu.memory_space<vmem>>, vector<8x1xf32>,
    return
  }
  func.func @transform_0(%arg0: i32) -> (i32, i32) {
    %c0_i32 = arith.constant 0 : i32
    %c0_i32_0 = arith.constant 0 : i32
    return %arg0, %c0_i32 : i32, i32
  }
  func.func @transform_1(%arg0: i32) -> (i32, i32) {
    %c0_i32 = arith.constant 0 : i32
    %c0_i32_0 = arith.constant 0 : i32
    %c0_i32_1 = arith.constant 0 : i32
    return %c0_i32, %c0_i32_0 : i32, i32
  }
  func.func @transform_2(%arg0: i32) -> (i32, i32) {
    %c0_i32 = arith.constant 0 : i32
    %c0_i32_0 = arith.constant 0 : i32
    %c0_i32_1 = arith.constant 0 : i32
    return %c0_i32, %c0_i32_0 : i32, i32
  }
  func.func @transform_3(%arg0: i32) -> (i32, i32) {
    %c0_i32 = arith.constant 0 : i32
    %c0_i32_0 = arith.constant 0 : i32
    return %arg0, %c0_i32 : i32, i32
  }
}

</mosaic_0001>

<llo_original>
// kernel: tpu_custom_call.1
$region0: #{tpu_custom_call.1}
  #allocation0 [shape = 'u32[]', space=smem, size = 0x4, offset = 0x4, fixed_abs, tag = 'smem constant byte address 0x4 - core index']
  #allocation1 [shape = 'u32[72,128]{1,0:T(1,128)}', space=vmem, size = 0x9000, scoped, tag = 'internal scratch']
  #allocation2 [shape = 'f32[1,1]{1,0:T(1,128)S(6)}', space=smem, size = 0x200, scoped, tag = 'scoped memory for tpu_custom_call.1']
  %s0 = inlined_call_operand.vmem [shape: f32[8,768], index: 0, kind: input, shape index: {}]
  %s1 = inlined_call_operand.vmem [shape: f32[768,1], index: 1, kind: input, shape index: {}]
  %s2 = inlined_call_operand.<no memory space> [shape: f32[1,1], index: 2, kind: input, shape index: {}]
  %s3 = inlined_call_operand.vmem [shape: f32[8,1], index: 3, kind: output, shape index: {}]
  %s4 = sld [smem:[#allocation0]]
  $region22: #{tpu_custom_call.1} parent=0
    _
  %s6 = ssub.s32 1, %s4
  %s7 = scalar_select 0, %s6, %s4
  %8 = sst [smem:[#allocation2]] %s2
  // Predicated region
  $region2: #{tpu_custom_call.1} parent=0 // pred_check
    _
  $region3: #{tpu_custom_call.1} parent=0 // pred_check_branch
    %10 = sbr.rel (0) target = $region5
  $region4: #{tpu_custom_call.1} parent=0 // pred_region
    _
  $region5: #{tpu_custom_call.1} parent=0 // pred_fallthru
    _
  // Predicated region
  $region6: #{tpu_custom_call.1} parent=0 // pred_check
    _
  $region7: #{tpu_custom_call.1} parent=0 // pred_check_branch
    %12 = sbr.rel (0) target = $region9
  $region8: #{tpu_custom_call.1} parent=0 // pred_region
    _
  $region9: #{tpu_custom_call.1} parent=0 // pred_fallthru
    _
  // Predicated region
  $region10: #{tpu_custom_call.1} parent=0 // pred_check
    _
  $region11: #{tpu_custom_call.1} parent=0 // pred_check_branch
    %14 = sbr.rel (0) target = $region13
  $region12: #{tpu_custom_call.1} parent=0 // pred_region
    _
  $region13: #{tpu_custom_call.1} parent=0 // pred_fallthru
    _
  %v15 = vld [vmem:[%s0] sm:$0xff]
  %v16 = vld [vmem:[%s0 + $0x8] sm:$0xff]
  %v17 = vld [vmem:[%s0 + $0x10] sm:$0xff]
  %v18 = vld [vmem:[%s0 + $0x18] sm:$0xff]
  %v19 = vld [vmem:[%s0 + $0x20] sm:$0xff]
  %v20 = vld [vmem:[%s0 + $0x28] sm:$0xff]
  %v21 = vld [vmem:[%s1] sm:$0xff]
  %v22 = vld [vmem:[%s1 + $0x8] sm:$0xff]
  %v23 = vld [vmem:[%s1 + $0x10] sm:$0xff]
  %v24 = vld [vmem:[%s1 + $0x18] sm:$0xff]
  %v25 = vld [vmem:[%s1 + $0x20] sm:$0xff]
  %v26 = vld [vmem:[%s1 + $0x28] sm:$0xff]
  %v27 = vld [vmem:[%s1 + $0x30] sm:$0xff]
  %v28 = vld [vmem:[%s1 + $0x38] sm:$0xff]
  %v29 = vld [vmem:[%s1 + $0x40] sm:$0xff]
  %v30 = vld [vmem:[%s1 + $0x48] sm:$0xff]
  %v31 = vld [vmem:[%s1 + $0x50] sm:$0xff]
  %v32 = vld [vmem:[%s1 + $0x58] sm:$0xff]
  %v33 = vld [vmem:[%s1 + $0x60] sm:$0xff]
  %v34 = vld [vmem:[%s1 + $0x68] sm:$0xff]
  %v35 = vld [vmem:[%s1 + $0x70] sm:$0xff]
  %v36 = vld [vmem:[%s1 + $0x78] sm:$0xff]
  %v37 = vld [vmem:[%s1 + $0x80] sm:$0xff]
  %v38 = vld [vmem:[%s1 + $0x88] sm:$0xff]
  %v39 = vld [vmem:[%s1 + $0x90] sm:$0xff]
  %v40 = vld [vmem:[%s1 + $0x98] sm:$0xff]
  %v41 = vld [vmem:[%s1 + $0xa0] sm:$0xff]
  %v42 = vld [vmem:[%s1 + $0xa8] sm:$0xff]
  %v43 = vld [vmem:[%s1 + $0xb0] sm:$0xff]
  %v44 = vld [vmem:[%s1 + $0xb8] sm:$0xff]
  %v45 = vld [vmem:[%s1 + $0xc0] sm:$0xff]
  %v46 = vld [vmem:[%s1 + $0xc8] sm:$0xff]
  %v47 = vld [vmem:[%s1 + $0xd0] sm:$0xff]
  %v48 = vld [vmem:[%s1 + $0xd8] sm:$0xff]
  %v49 = vld [vmem:[%s1 + $0xe0] sm:$0xff]
  %v50 = vld [vmem:[%s1 + $0xe8] sm:$0xff]
  %v51 = vld [vmem:[%s1 + $0xf0] sm:$0xff]
  %v52 = vld [vmem:[%s1 + $0xf8] sm:$0xff]
  %v53 = vld [vmem:[%s1 + $0x100] sm:$0xff]
  %v54 = vld [vmem:[%s1 + $0x108] sm:$0xff]
  %v55 = vld [vmem:[%s1 + $0x110] sm:$0xff]
  %v56 = vld [vmem:[%s1 + $0x118] sm:$0xff]
  %v57 = vld [vmem:[%s1 + $0x120] sm:$0xff]
  %v58 = vld [vmem:[%s1 + $0x128] sm:$0xff]
  %v59 = vld [vmem:[%s1 + $0x130] sm:$0xff]
  %v60 = vld [vmem:[%s1 + $0x138] sm:$0xff]
  %v61 = vld [vmem:[%s1 + $0x140] sm:$0xff]
  %v62 = vld [vmem:[%s1 + $0x148] sm:$0xff]
  %v63 = vld [vmem:[%s1 + $0x150] sm:$0xff]
  %v64 = vld [vmem:[%s1 + $0x158] sm:$0xff]
  %v65 = vld [vmem:[%s1 + $0x160] sm:$0xff]
  %v66 = vld [vmem:[%s1 + $0x168] sm:$0xff]
  %v67 = vld [vmem:[%s1 + $0x170] sm:$0xff]
  %v68 = vld [vmem:[%s1 + $0x178] sm:$0xff]
  %v69 = vld [vmem:[%s1 + $0x180] sm:$0xff]
  %v70 = vld [vmem:[%s1 + $0x188] sm:$0xff]
  %v71 = vld [vmem:[%s1 + $0x190] sm:$0xff]
  %v72 = vld [vmem:[%s1 + $0x198] sm:$0xff]
  %v73 = vld [vmem:[%s1 + $0x1a0] sm:$0xff]
  %v74 = vld [vmem:[%s1 + $0x1a8] sm:$0xff]
  %v75 = vld [vmem:[%s1 + $0x1b0] sm:$0xff]
  %v76 = vld [vmem:[%s1 + $0x1b8] sm:$0xff]
  %v77 = vld [vmem:[%s1 + $0x1c0] sm:$0xff]
  %v78 = vld [vmem:[%s1 + $0x1c8] sm:$0xff]
  %v79 = vld [vmem:[%s1 + $0x1d0] sm:$0xff]
  %v80 = vld [vmem:[%s1 + $0x1d8] sm:$0xff]
  %v81 = vld [vmem:[%s1 + $0x1e0] sm:$0xff]
  %v82 = vld [vmem:[%s1 + $0x1e8] sm:$0xff]
  %v83 = vld [vmem:[%s1 + $0x1f0] sm:$0xff]
  %v84 = vld [vmem:[%s1 + $0x1f8] sm:$0xff]
  %v85 = vld [vmem:[%s1 + $0x200] sm:$0xff]
  %v86 = vld [vmem:[%s1 + $0x208] sm:$0xff]
  %v87 = vld [vmem:[%s1 + $0x210] sm:$0xff]
  %v88 = vld [vmem:[%s1 + $0x218] sm:$0xff]
  %v89 = vld [vmem:[%s1 + $0x220] sm:$0xff]
  %v90 = vld [vmem:[%s1 + $0x228] sm:$0xff]
  %v91 = vld [vmem:[%s1 + $0x230] sm:$0xff]
  %v92 = vld [vmem:[%s1 + $0x238] sm:$0xff]
  %v93 = vld [vmem:[%s1 + $0x240] sm:$0xff]
  %v94 = vld [vmem:[%s1 + $0x248] sm:$0xff]
  %v95 = vld [vmem:[%s1 + $0x250] sm:$0xff]
  %v96 = vld [vmem:[%s1 + $0x258] sm:$0xff]
  %v97 = vld [vmem:[%s1 + $0x260] sm:$0xff]
  %v98 = vld [vmem:[%s1 + $0x268] sm:$0xff]
  %v99 = vld [vmem:[%s1 + $0x270] sm:$0xff]
  %v100 = vld [vmem:[%s1 + $0x278] sm:$0xff]
  %v101 = vld [vmem:[%s1 + $0x280] sm:$0xff]
  %v102 = vld [vmem:[%s1 + $0x288] sm:$0xff]
  %v103 = vld [vmem:[%s1 + $0x290] sm:$0xff]
  %v104 = vld [vmem:[%s1 + $0x298] sm:$0xff]
  %v105 = vld [vmem:[%s1 + $0x2a0] sm:$0xff]
  %v106 = vld [vmem:[%s1 + $0x2a8] sm:$0xff]
  %v107 = vld [vmem:[%s1 + $0x2b0] sm:$0xff]
  %v108 = vld [vmem:[%s1 + $0x2b8] sm:$0xff]
  %v109 = vld [vmem:[%s1 + $0x2c0] sm:$0xff]
  %v110 = vld [vmem:[%s1 + $0x2c8] sm:$0xff]
  %v111 = vld [vmem:[%s1 + $0x2d0] sm:$0xff]
  %v112 = vld [vmem:[%s1 + $0x2d8] sm:$0xff]
  %v113 = vld [vmem:[%s1 + $0x2e0] sm:$0xff]
  %v114 = vld [vmem:[%s1 + $0x2e8] sm:$0xff]
  %v115 = vld [vmem:[%s1 + $0x2f0] sm:$0xff]
  %v116 = vld [vmem:[%s1 + $0x2f8] sm:$0xff]
  %s117 = sld [smem:[#allocation2]]
  %v118 = vstv %s117
  %119 = vmatpush.msra.mxu0 %v36
  %120 = vmatpush.msra.mxu0 %v35
  %121 = vmatpush.msra.mxu0 %v34
  %122 = vmatpush.msra.mxu0 %v33
  %123 = vmatpush.msra.mxu0 %v32
  %124 = vmatpush.msra.mxu0 %v31
  %125 = vmatpush.msra.mxu0 %v30
  %126 = vmatpush.msra.mxu0 %v29
  %127 = vmatpush.msra.mxu0 %v28
  %128 = vmatpush.msra.mxu0 %v27
  %129 = vmatpush.msra.mxu0 %v26
  %130 = vmatpush.msra.mxu0 %v25
  %131 = vmatpush.msra.mxu0 %v24
  %132 = vmatpush.msra.mxu0 %v23
  %133 = vmatpush.msra.mxu0 %v22
  %134 = vmatpush.msra.mxu0 %v21
  %135 = vmatmul.f32.gmra.mxu0 %v15
  %v136 = vpop.f32.mrf.mxu0
  %v137 = vadd.f32 %v118, %v136
  %138 = vdwg.mxu0
  %139 = vmatpush.msra.mxu0 %v52
  %140 = vmatpush.msra.mxu0 %v51
  %141 = vmatpush.msra.mxu0 %v50
  %142 = vmatpush.msra.mxu0 %v49
  %143 = vmatpush.msra.mxu0 %v48
  %144 = vmatpush.msra.mxu0 %v47
  %145 = vmatpush.msra.mxu0 %v46
  %146 = vmatpush.msra.mxu0 %v45
  %147 = vmatpush.msra.mxu0 %v44
  %148 = vmatpush.msra.mxu0 %v43
  %149 = vmatpush.msra.mxu0 %v42
  %150 = vmatpush.msra.mxu0 %v41
  %151 = vmatpush.msra.mxu0 %v40
  %152 = vmatpush.msra.mxu0 %v39
  %153 = vmatpush.msra.mxu0 %v38
  %154 = vmatpush.msra.mxu0 %v37
  %155 = vmatmul.f32.gmra.mxu0 %v16
  %v156 = vpop.f32.mrf.mxu0
  %v157 = vadd.f32 %v137, %v156
  %158 = vdwg.mxu0
  %159 = vmatpush.msra.mxu0 %v68
  %160 = vmatpush.msra.mxu0 %v67
  %161 = vmatpush.msra.mxu0 %v66
  %162 = vmatpush.msra.mxu0 %v65
  %163 = vmatpush.msra.mxu0 %v64
  %164 = vmatpush.msra.mxu0 %v63
  %165 = vmatpush.msra.mxu0 %v62
  %166 = vmatpush.msra.mxu0 %v61
  %167 = vmatpush.msra.mxu0 %v60
  %168 = vmatpush.msra.mxu0 %v59
  %169 = vmatpush.msra.mxu0 %v58
  %170 = vmatpush.msra.mxu0 %v57
  %171 = vmatpush.msra.mxu0 %v56
  %172 = vmatpush.msra.mxu0 %v55
  %173 = vmatpush.msra.mxu0 %v54
  %174 = vmatpush.msra.mxu0 %v53
  %175 = vmatmul.f32.gmra.mxu0 %v17
  %v176 = vpop.f32.mrf.mxu0
  %v177 = vadd.f32 %v157, %v176
  %178 = vdwg.mxu0
  %179 = vmatpush.msra.mxu0 %v84
  %180 = vmatpush.msra.mxu0 %v83
  %181 = vmatpush.msra.mxu0 %v82
  %182 = vmatpush.msra.mxu0 %v81
  %183 = vmatpush.msra.mxu0 %v80
  %184 = vmatpush.msra.mxu0 %v79
  %185 = vmatpush.msra.mxu0 %v78
  %186 = vmatpush.msra.mxu0 %v77
  %187 = vmatpush.msra.mxu0 %v76
  %188 = vmatpush.msra.mxu0 %v75
  %189 = vmatpush.msra.mxu0 %v74
  %190 = vmatpush.msra.mxu0 %v73
  %191 = vmatpush.msra.mxu0 %v72
  %192 = vmatpush.msra.mxu0 %v71
  %193 = vmatpush.msra.mxu0 %v70
  %194 = vmatpush.msra.mxu0 %v69
  %195 = vmatmul.f32.gmra.mxu0 %v18
  %v196 = vpop.f32.mrf.mxu0
  %v197 = vadd.f32 %v177, %v196
  %198 = vdwg.mxu0
  %199 = vmatpush.msra.mxu0 %v100
  %200 = vmatpush.msra.mxu0 %v99
  %201 = vmatpush.msra.mxu0 %v98
  %202 = vmatpush.msra.mxu0 %v97
  %203 = vmatpush.msra.mxu0 %v96
  %204 = vmatpush.msra.mxu0 %v95
  %205 = vmatpush.msra.mxu0 %v94
  %206 = vmatpush.msra.mxu0 %v93
  %207 = vmatpush.msra.mxu0 %v92
  %208 = vmatpush.msra.mxu0 %v91
  %209 = vmatpush.msra.mxu0 %v90
  %210 = vmatpush.msra.mxu0 %v89
  %211 = vmatpush.msra.mxu0 %v88
  %212 = vmatpush.msra.mxu0 %v87
  %213 = vmatpush.msra.mxu0 %v86
  %214 = vmatpush.msra.mxu0 %v85
  %215 = vmatmul.f32.gmra.mxu0 %v19
  %v216 = vpop.f32.mrf.mxu0
  %v217 = vadd.f32 %v197, %v216
  %218 = vdwg.mxu0
  %219 = vmatpush.msra.mxu0 %v116
  %220 = vmatpush.msra.mxu0 %v115
  %221 = vmatpush.msra.mxu0 %v114
  %222 = vmatpush.msra.mxu0 %v113
  %223 = vmatpush.msra.mxu0 %v112
  %224 = vmatpush.msra.mxu0 %v111
  %225 = vmatpush.msra.mxu0 %v110
  %226 = vmatpush.msra.mxu0 %v109
  %227 = vmatpush.msra.mxu0 %v108
  %228 = vmatpush.msra.mxu0 %v107
  %229 = vmatpush.msra.mxu0 %v106
  %230 = vmatpush.msra.mxu0 %v105
  %231 = vmatpush.msra.mxu0 %v104
  %232 = vmatpush.msra.mxu0 %v103
  %233 = vmatpush.msra.mxu0 %v102
  %234 = vmatpush.msra.mxu0 %v101
  %235 = vmatmul.f32.gmra.mxu0 %v20
  %v236 = vpop.f32.mrf.mxu0
  %v237 = vadd.f32 %v217, %v236
  %238 = vdwg.mxu0
  %vm239 = vcmask 7168
  %240 = vst.msk [vmem:[%s3] sm:$0xff] %vm239, %v237
  // Predicated region
  $region14: #{tpu_custom_call.1} parent=0 // pred_check
    _
  $region15: #{tpu_custom_call.1} parent=0 // pred_check_branch
    %242 = sbr.rel (0) target = $region17
  $region16: #{tpu_custom_call.1} parent=0 // pred_region
    _
  $region17: #{tpu_custom_call.1} parent=0 // pred_fallthru
    _
  // Predicated region
  $region18: #{tpu_custom_call.1} parent=0 // pred_check
    _
  $region19: #{tpu_custom_call.1} parent=0 // pred_check_branch
    %244 = sbr.rel (0) target = $region21
  $region20: #{tpu_custom_call.1} parent=0 // pred_region
    _
  $region21: #{tpu_custom_call.1} parent=0 // pred_fallthru
    _

</llo_original>
